<compile_context>
chip_gen: v7x
topology: tpu7x:2x2x1
jax: 0.10.0
libtpu: 0.0.40
codegen_flags: <defaults>
</compile_context>

<pallas_src>
import functools

import jax
import jax.numpy as jnp
from jax.experimental import pallas as pl
from jax.experimental.pallas import tpu as pltpu


def _round_up(v, m):
    return ((v + m - 1) // m) * m


def _segmerge_kernel(x_ref, w_ref, wcol_ref, b_ref, o_ref, *,
                     eps, inv_feat, matmul_dtype):
    # x_ref    : (TM, feat)  merged-segment rows (native dtype, unpadded)
    # w_ref    : (feat, D)   gamma-folded projection weight (matmul dtype)
    # wcol_ref : (1, D)      column sums of w_ref (f32)
    # b_ref    : (1, D)      beta-folded projection bias (f32)
    # o_ref    : (TM, D)
    x = x_ref[...]

    # One-pass LayerNorm statistics in f32 (row-independent, so garbage rows
    # of a partial last block never contaminate valid rows).
    xf = x.astype(jnp.float32)
    s = jnp.sum(xf, axis=-1, keepdims=True)
    ss = jnp.sum(xf * xf, axis=-1, keepdims=True)
    mean = s * inv_feat
    var = ss * inv_feat - mean * mean
    rstd = jax.lax.rsqrt(jnp.maximum(var, 0.0) + eps)

    # MXU matmul on the *raw* input tile; normalization folded in afterwards:
    #   ((x - mean) * rstd) @ W = rstd * (x @ W) - (rstd * mean) * colsum(W)
    acc = jnp.dot(x.astype(matmul_dtype), w_ref[...],
                  preferred_element_type=jnp.float32)
    y = rstd * acc - (rstd * mean) * wcol_ref[...] + b_ref[...]
    o_ref[...] = y.astype(o_ref.dtype)


def segment_merging(x, params, *, window_size, eps=1e-5, tile_rows=512,
                    use_bf16_matmul=False, input_buffers=2):
    """Pallas implementation of SegmentMerging.forward.

    Args:
      x: (batch, data_dim, seg_num, model_dim) array.
      params: dict with 'gamma','beta' (window*model_dim,), 'weight'
              (model_dim, window*model_dim) [torch nn.Linear layout],
              'bias' (model_dim,).
      tile_rows: desired row tile (auto-clamped to rows / sublane packing /
                 VMEM budget).
      use_bf16_matmul: opt-in bf16 MXU path for f32 activations (lower
                 precision, ~2-3x faster matmul + half the input DMA bytes).
      input_buffers: pipeline depth for the activation input (e.g. 3 on v5e
                 if the profile shows exposed DMA); 2 = default pipeline.
    Returns:
      (batch, data_dim, ceil(seg_num/window), model_dim) array.
    """
    b, d, seg_num, model_dim = x.shape
    w = window_size
    feat = w * model_dim

    # --- tail replication (torch: cat(x, x[:, :, -pad_num:, :])) -----------
    # Only materialized when seg_num is ragged; the divisible case is a
    # zero-copy reshape.  (Folding the ragged tail into the kernel via a
    # scalar-prefetched segment table would remove this last copy too, but is
    # intentionally left out for robustness -- it costs one extra input
    # read+write only when seg_num % window != 0.)
    pad_num = (-seg_num) % w
    if pad_num:
        x = jnp.concatenate([x, x[:, :, -pad_num:, :]], axis=2)
    merged = x.shape[2] // w
    rows = b * d * merged

    # Free view: contiguous (B, D, merged*w, md) -> (rows, w*md) preserves the
    # exact element ordering of torch.cat([x[:,:,i::w,:] for i], -1).
    x2d = x.reshape(rows, feat)

    # --- fold LayerNorm affine into the projection (once, in the wrapper) ---
    gamma = params["gamma"].astype(jnp.float32)                   # (feat,)
    beta = params["beta"].astype(jnp.float32)                     # (feat,)
    w_t = params["weight"].astype(jnp.float32).T                  # (feat, D)
    w_fold = gamma[:, None] * w_t                                 # (feat, D)
    b_fold = beta @ w_t + params["bias"].astype(jnp.float32)      # (D,)

    matmul_dtype = (jnp.bfloat16
                    if (x.dtype == jnp.bfloat16 or use_bf16_matmul)
                    else jnp.float32)
    w_cast = w_fold.astype(matmul_dtype)                          # (feat, D)
    # Column sums of the *actually used* weight, f32 (exact shift term).
    wcol = jnp.sum(w_cast.astype(jnp.float32), axis=0, keepdims=True)  # (1, D)
    b2 = b_fold.reshape(1, model_dim)                             # (1, D) f32

    # --- generation-aware tile / VMEM sizing --------------------------------
    itemsize = jnp.dtype(x.dtype).itemsize
    w_itemsize = jnp.dtype(matmul_dtype).itemsize
    pack = max(8, 32 // itemsize)          # sublane packing: 8 f32, 16 bf16

    try:
        vmem_cap = int(pltpu.get_tpu_info().vmem_capacity_bytes)
    except Exception:
        vmem_cap = 64 << 20                # conservative (v7x-sized) fallback
    vmem_budget = int(0.8 * vmem_cap)      # leave headroom for Mosaic scratch

    try:
        kind = jax.devices()[0].device_kind.lower()
    except Exception:
        kind = ""
    multi_tc = ("7x" in kind) or ("v7" in kind)   # v7x: 2 TensorCores/chip

    tr = max(pack, min(_round_up(tile_rows, pack), _round_up(rows, pack)))

    def vmem_est(t):
        return (input_buffers * t * feat * itemsize      # x pipeline buffers
                + 2 * t * model_dim * itemsize           # out double buffer
                + feat * model_dim * w_itemsize          # W (single-buffered)
                + 4 * model_dim * 4                      # wcol + bias
                + 4 * t * feat                           # f32 LN temporaries
                + 8 * t * model_dim)                     # f32 acc + y

    while tr > pack and vmem_est(tr) > 0.9 * vmem_budget:
        tr = max(pack, _round_up(tr // 2, pack))

    # Only force >=2 grid steps on multi-TC parts so both cores get work;
    # on v5e/v6e a single big tile avoids extra grid-step overhead.
    if multi_tc and rows > pack and pl.cdiv(rows, tr) < 2:
        tr = max(pack, _round_up(pl.cdiv(rows, 2), pack))

    grid = (pl.cdiv(rows, tr),)

    cost = pl.CostEstimate(
        flops=2 * rows * feat * model_dim,
        bytes_accessed=(rows * feat * itemsize
                        + feat * model_dim * w_itemsize
                        + rows * model_dim * itemsize),
        transcendentals=rows,
    )

    kernel = functools.partial(_segmerge_kernel, eps=eps, inv_feat=1.0 / feat,
                               matmul_dtype=matmul_dtype)

    def run(single_buffer_consts):
        def const_spec(shape):
            if single_buffer_consts:
                return pl.BlockSpec(shape, lambda i: (0, 0),
                                    pipeline_mode=pl.Buffered(1))
            return pl.BlockSpec(shape, lambda i: (0, 0))

        if input_buffers != 2:
            x_spec = pl.BlockSpec((tr, feat), lambda i: (i, 0),
                                  pipeline_mode=pl.Buffered(input_buffers))
        else:
            x_spec = pl.BlockSpec((tr, feat), lambda i: (i, 0))

        return pl.pallas_call(
            kernel,
            out_shape=jax.ShapeDtypeStruct((rows, model_dim), x.dtype),
            grid_spec=pltpu.PrefetchScalarGridSpec(
                num_scalar_prefetch=0,
                grid=grid,
                in_specs=[
                    x_spec,
                    const_spec((feat, model_dim)),
                    const_spec((1, model_dim)),
                    const_spec((1, model_dim)),
                ],
                out_specs=pl.BlockSpec((tr, model_dim), lambda i: (i, 0)),
            ),
            compiler_params=pltpu.CompilerParams(
                dimension_semantics=("parallel",),
                vmem_limit_bytes=int(vmem_budget)),
            cost_estimate=cost,
        )(x2d, w_cast, wcol, b2)

    try:
        out2d = run(True)       # single-buffered grid-invariant weight/bias
    except Exception:
        out2d = run(False)      # older jax: default double-buffered consts

    return out2d.reshape(b, d, merged, model_dim)


def segment_merging_ref(x, params, *, window_size, eps=1e-5):
    """Pure-JAX reference matching the PyTorch forward (unfused affine)."""
    b, d, seg_num, model_dim = x.shape
    w = window_size
    pad_num = (-seg_num) % w
    if pad_num:
        x = jnp.concatenate([x, x[:, :, -pad_num:, :]], axis=2)
    merged = x.shape[2] // w
    xm = x.reshape(b, d, merged, w * model_dim).astype(jnp.float32)
    mean = jnp.mean(xm, axis=-1, keepdims=True)
    var = jnp.mean((xm - mean) ** 2, axis=-1, keepdims=True)
    xn = (xm - mean) / jnp.sqrt(var + eps)
    xn = xn * params["gamma"] + params["beta"]
    y = jnp.einsum("bdsf,of->bdso", xn, params["weight"]) + params["bias"]
    return y.astype(x.dtype)


if __name__ == "__main__":
    master_key = jax.random.PRNGKey(0)

    def make_case(batch, data_dim, seg_num, model_dim, window, key):
        kx, kg, kb, kw, kbias = jax.random.split(key, 5)
        x = jax.random.normal(kx, (batch, data_dim, seg_num, model_dim),
                              jnp.float32)
        feat = window * model_dim
        params = {
            "gamma": 1.0 + 0.1 * jax.random.normal(kg, (feat,), jnp.float32),
            "beta": 0.1 * jax.random.normal(kb, (feat,), jnp.float32),
            "weight": 0.05 * jax.random.normal(kw, (model_dim, feat), jnp.float32),
            "bias": 0.05 * jax.random.normal(kbias, (model_dim,), jnp.float32),
        }
        return x, params

    # (batch, data_dim, seg_num, model_dim, window, tile_rows)
    cases = [
        (2, 4, 7, 32, 2, 512),   # ragged seg_num -> exercises tail replication
        (2, 4, 8, 32, 2, 512),   # divisible      -> zero-copy wrapper path
        (1, 3, 7, 32, 2, 8),     # rows=12, tile=8 -> exercises partial last block
    ]
    keys = jax.random.split(master_key, len(cases))
    for (batch, data_dim, seg_num, model_dim, window, tr), k in zip(cases, keys):
        x, params = make_case(batch, data_dim, seg_num, model_dim, window, k)
        out = segment_merging(x, params, window_size=window, tile_rows=tr)
        out = jax.block_until_ready(out)
        ref = segment_merging_ref(x, params, window_size=window)
        merged = -(-seg_num // window)
        assert out.shape == (batch, data_dim, merged, model_dim), out.shape
        max_err = float(jnp.max(jnp.abs(out - ref)))
        assert jnp.allclose(out, ref, atol=2e-4, rtol=2e-4), f"max err {max_err}"

    print("KERNEL_OK")
</pallas_src>

<mosaic_0001>
module attributes {stable_mosaic.version = 11 : i64} {
  func.func @_segmerge_kernel(%arg0: i32, %arg1: memref<32x64xf32, #tpu.memory_space<vmem>>, %arg2: memref<64x32xf32, #tpu.memory_space<vmem>>, %arg3: memref<1x32xf32, #tpu.memory_space<vmem>>, %arg4: memref<1x32xf32, #tpu.memory_space<vmem>>, %arg5: memref<32x32xf32, #tpu.memory_space<vmem>>) attributes {dimension_semantics = [#tpu.dimension_semantics<parallel>], iteration_bounds = array<i64: 1>, scalar_prefetch = 0 : i64, scratch_operands = 0 : i64, tpu.core_type = #tpu.core_type<tc>, window_params = [{transform_indices = @transform_0, window_bounds = array<i64: 32, 64>}, {pipeline_mode = #tpu.pipeline_mode<synchronous>, transform_indices = @transform_1, window_bounds = array<i64: 64, 32>}, {pipeline_mode = #tpu.pipeline_mode<synchronous>, transform_indices = @transform_2, window_bounds = array<i64: 1, 32>}, {pipeline_mode = #tpu.pipeline_mode<synchronous>, transform_indices = @transform_3, window_bounds = array<i64: 1, 32>}, {transform_indices = @transform_4, window_bounds = array<i64: 32, 32>}]} {
    %c0 = arith.constant 0 : index
    %c0_0 = arith.constant 0 : index
    %0 = vector.load %arg1[%c0, %c0_0] : memref<32x64xf32, #tpu.memory_space<vmem>>, vector<32x64xf32>
    %cst = arith.constant dense<0.000000e+00> : vector<32xf32>
    %1 = vector.multi_reduction <add>, %0, %cst [1] : vector<32x64xf32> to vector<32xf32>
    %2 = vector.shape_cast %1 : vector<32xf32> to vector<32x1xf32>
    %3 = arith.mulf %0, %0 : vector<32x64xf32>
    %cst_1 = arith.constant dense<0.000000e+00> : vector<32xf32>
    %4 = vector.multi_reduction <add>, %3, %cst_1 [1] : vector<32x64xf32> to vector<32xf32>
    %5 = vector.shape_cast %4 : vector<32xf32> to vector<32x1xf32>
    %cst_2 = arith.constant 1.562500e-02 : f32
    %6 = vector.broadcast %cst_2 : f32 to vector<32x1xf32>
    %7 = arith.mulf %2, %6 : vector<32x1xf32>
    %cst_3 = arith.constant 1.562500e-02 : f32
    %8 = vector.broadcast %cst_3 : f32 to vector<32x1xf32>
    %9 = arith.mulf %5, %8 : vector<32x1xf32>
    %10 = arith.mulf %7, %7 : vector<32x1xf32>
    %11 = arith.subf %9, %10 : vector<32x1xf32>
    %cst_4 = arith.constant 0.000000e+00 : f32
    %12 = vector.broadcast %cst_4 : f32 to vector<32x1xf32>
    %13 = arith.maximumf %11, %12 : vector<32x1xf32>
    %cst_5 = arith.constant 9.99999974E-6 : f32
    %14 = vector.broadcast %cst_5 : f32 to vector<32x1xf32>
    %15 = arith.addf %13, %14 : vector<32x1xf32>
    %16 = math.rsqrt %15 : vector<32x1xf32>
    %c0_6 = arith.constant 0 : index
    %c0_7 = arith.constant 0 : index
    %17 = vector.load %arg2[%c0_6, %c0_7] : memref<64x32xf32, #tpu.memory_space<vmem>>, vector<64x32xf32>
    %cst_8 = arith.constant dense<0.000000e+00> : vector<32x32xf32>
    %18 = tpu.matmul %0, %17, %cst_8 {dimension_numbers = #tpu.dot_dimension_numbers<[1], [0], [0], [1], [0, 0, 1, 1], [], []>} : vector<32x64xf32>, vector<64x32xf32>, vector<32x32xf32> -> vector<32x32xf32>
    %19 = vector.broadcast %16 : vector<32x1xf32> to vector<32x32xf32>
    %20 = arith.mulf %19, %18 : vector<32x32xf32>
    %21 = arith.mulf %16, %7 : vector<32x1xf32>
    %c0_9 = arith.constant 0 : index
    %c0_10 = arith.constant 0 : index
    %22 = vector.load %arg3[%c0_9, %c0_10] : memref<1x32xf32, #tpu.memory_space<vmem>>, vector<1x32xf32>
    %23 = vector.broadcast %21 : vector<32x1xf32> to vector<32x32xf32>
    %24 = vector.broadcast %22 : vector<1x32xf32> to vector<32x32xf32>
    %25 = arith.mulf %23, %24 : vector<32x32xf32>
    %26 = arith.subf %20, %25 : vector<32x32xf32>
    %c0_11 = arith.constant 0 : index
    %c0_12 = arith.constant 0 : index
    %27 = vector.load %arg4[%c0_11, %c0_12] : memref<1x32xf32, #tpu.memory_space<vmem>>, vector<1x32xf32>
    %28 = vector.broadcast %27 : vector<1x32xf32> to vector<32x32xf32>
    %29 = arith.addf %26, %28 : vector<32x32xf32>
    %c0_13 = arith.constant 0 : index
    %c0_14 = arith.constant 0 : index
    %30 = vector.load %arg5[%c0_13, %c0_14] : memref<32x32xf32, #tpu.memory_space<vmem>>, vector<32x32xf32>
    tpu.vector_store %arg5[%c0_13, %c0_14], %29 {strides = array<i32>} : memref<32x32xf32, #tpu.memory_space<vmem>>, vector<32x32xf32>,
    return
  }
  func.func @transform_0(%arg0: i32) -> (i32, i32) {
    %c0_i32 = arith.constant 0 : i32
    %c0_i32_0 = arith.constant 0 : i32
    return %arg0, %c0_i32 : i32, i32
  }
  func.func @transform_1(%arg0: i32) -> (i32, i32) {
    %c0_i32 = arith.constant 0 : i32
    %c0_i32_0 = arith.constant 0 : i32
    %c0_i32_1 = arith.constant 0 : i32
    return %c0_i32, %c0_i32_0 : i32, i32
  }
  func.func @transform_2(%arg0: i32) -> (i32, i32) {
    %c0_i32 = arith.constant 0 : i32
    %c0_i32_0 = arith.constant 0 : i32
    %c0_i32_1 = arith.constant 0 : i32
    return %c0_i32, %c0_i32_0 : i32, i32
  }
  func.func @transform_3(%arg0: i32) -> (i32, i32) {
    %c0_i32 = arith.constant 0 : i32
    %c0_i32_0 = arith.constant 0 : i32
    %c0_i32_1 = arith.constant 0 : i32
    return %c0_i32, %c0_i32_0 : i32, i32
  }
  func.func @transform_4(%arg0: i32) -> (i32, i32) {
    %c0_i32 = arith.constant 0 : i32
    %c0_i32_0 = arith.constant 0 : i32
    return %arg0, %c0_i32 : i32, i32
  }
}

module attributes {stable_mosaic.version = 11 : i64} {
  func.func @_segmerge_kernel(%arg0: i32, %arg1: memref<32x64xf32, #tpu.memory_space<vmem>>, %arg2: memref<64x32xf32, #tpu.memory_space<vmem>>, %arg3: memref<1x32xf32, #tpu.memory_space<vmem>>, %arg4: memref<1x32xf32, #tpu.memory_space<vmem>>, %arg5: memref<32x32xf32, #tpu.memory_space<vmem>>) attributes {dimension_semantics = [#tpu.dimension_semantics<parallel>], iteration_bounds = array<i64: 1>, scalar_prefetch = 0 : i64, scratch_operands = 0 : i64, tpu.core_type = #tpu.core_type<tc>, window_params = [{transform_indices = @transform_0, window_bounds = array<i64: 32, 64>}, {pipeline_mode = #tpu.pipeline_mode<synchronous>, transform_indices = @transform_1, window_bounds = array<i64: 64, 32>}, {pipeline_mode = #tpu.pipeline_mode<synchronous>, transform_indices = @transform_2, window_bounds = array<i64: 1, 32>}, {pipeline_mode = #tpu.pipeline_mode<synchronous>, transform_indices = @transform_3, window_bounds = array<i64: 1, 32>}, {transform_indices = @transform_4, window_bounds = array<i64: 32, 32>}]} {
    %c0 = arith.constant 0 : index
    %c0_0 = arith.constant 0 : index
    %0 = vector.load %arg1[%c0, %c0_0] : memref<32x64xf32, #tpu.memory_space<vmem>>, vector<32x64xf32>
    %cst = arith.constant dense<0.000000e+00> : vector<32xf32>
    %1 = vector.multi_reduction <add>, %0, %cst [1] : vector<32x64xf32> to vector<32xf32>
    %2 = vector.shape_cast %1 : vector<32xf32> to vector<32x1xf32>
    %3 = arith.mulf %0, %0 : vector<32x64xf32>
    %cst_1 = arith.constant dense<0.000000e+00> : vector<32xf32>
    %4 = vector.multi_reduction <add>, %3, %cst_1 [1] : vector<32x64xf32> to vector<32xf32>
    %5 = vector.shape_cast %4 : vector<32xf32> to vector<32x1xf32>
    %cst_2 = arith.constant 1.562500e-02 : f32
    %6 = vector.broadcast %cst_2 : f32 to vector<32x1xf32>
    %7 = arith.mulf %2, %6 : vector<32x1xf32>
    %cst_3 = arith.constant 1.562500e-02 : f32
    %8 = vector.broadcast %cst_3 : f32 to vector<32x1xf32>
    %9 = arith.mulf %5, %8 : vector<32x1xf32>
    %10 = arith.mulf %7, %7 : vector<32x1xf32>
    %11 = arith.subf %9, %10 : vector<32x1xf32>
    %cst_4 = arith.constant 0.000000e+00 : f32
    %12 = vector.broadcast %cst_4 : f32 to vector<32x1xf32>
    %13 = arith.maximumf %11, %12 : vector<32x1xf32>
    %cst_5 = arith.constant 9.99999974E-6 : f32
    %14 = vector.broadcast %cst_5 : f32 to vector<32x1xf32>
    %15 = arith.addf %13, %14 : vector<32x1xf32>
    %16 = math.rsqrt %15 : vector<32x1xf32>
    %c0_6 = arith.constant 0 : index
    %c0_7 = arith.constant 0 : index
    %17 = vector.load %arg2[%c0_6, %c0_7] : memref<64x32xf32, #tpu.memory_space<vmem>>, vector<64x32xf32>
    %cst_8 = arith.constant dense<0.000000e+00> : vector<32x32xf32>
    %18 = tpu.matmul %0, %17, %cst_8 {dimension_numbers = #tpu.dot_dimension_numbers<[1], [0], [0], [1], [0, 0, 1, 1], [], []>} : vector<32x64xf32>, vector<64x32xf32>, vector<32x32xf32> -> vector<32x32xf32>
    %19 = vector.broadcast %16 : vector<32x1xf32> to vector<32x32xf32>
    %20 = arith.mulf %19, %18 : vector<32x32xf32>
    %21 = arith.mulf %16, %7 : vector<32x1xf32>
    %c0_9 = arith.constant 0 : index
    %c0_10 = arith.constant 0 : index
    %22 = vector.load %arg3[%c0_9, %c0_10] : memref<1x32xf32, #tpu.memory_space<vmem>>, vector<1x32xf32>
    %23 = vector.broadcast %21 : vector<32x1xf32> to vector<32x32xf32>
    %24 = vector.broadcast %22 : vector<1x32xf32> to vector<32x32xf32>
    %25 = arith.mulf %23, %24 : vector<32x32xf32>
    %26 = arith.subf %20, %25 : vector<32x32xf32>
    %c0_11 = arith.constant 0 : index
    %c0_12 = arith.constant 0 : index
    %27 = vector.load %arg4[%c0_11, %c0_12] : memref<1x32xf32, #tpu.memory_space<vmem>>, vector<1x32xf32>
    %28 = vector.broadcast %27 : vector<1x32xf32> to vector<32x32xf32>
    %29 = arith.addf %26, %28 : vector<32x32xf32>
    %c0_13 = arith.constant 0 : index
    %c0_14 = arith.constant 0 : index
    %30 = vector.load %arg5[%c0_13, %c0_14] : memref<32x32xf32, #tpu.memory_space<vmem>>, vector<32x32xf32>
    tpu.vector_store %arg5[%c0_13, %c0_14], %29 {strides = array<i32>} : memref<32x32xf32, #tpu.memory_space<vmem>>, vector<32x32xf32>,
    return
  }
  func.func @transform_0(%arg0: i32) -> (i32, i32) {
    %c0_i32 = arith.constant 0 : i32
    %c0_i32_0 = arith.constant 0 : i32
    return %arg0, %c0_i32 : i32, i32
  }
  func.func @transform_1(%arg0: i32) -> (i32, i32) {
    %c0_i32 = arith.constant 0 : i32
    %c0_i32_0 = arith.constant 0 : i32
    %c0_i32_1 = arith.constant 0 : i32
    return %c0_i32, %c0_i32_0 : i32, i32
  }
  func.func @transform_2(%arg0: i32) -> (i32, i32) {
    %c0_i32 = arith.constant 0 : i32
    %c0_i32_0 = arith.constant 0 : i32
    %c0_i32_1 = arith.constant 0 : i32
    return %c0_i32, %c0_i32_0 : i32, i32
  }
  func.func @transform_3(%arg0: i32) -> (i32, i32) {
    %c0_i32 = arith.constant 0 : i32
    %c0_i32_0 = arith.constant 0 : i32
    %c0_i32_1 = arith.constant 0 : i32
    return %c0_i32, %c0_i32_0 : i32, i32
  }
  func.func @transform_4(%arg0: i32) -> (i32, i32) {
    %c0_i32 = arith.constant 0 : i32
    %c0_i32_0 = arith.constant 0 : i32
    return %arg0, %c0_i32 : i32, i32
  }
}

</mosaic_0001>

<llo_original>
// kernel: tpu_custom_call.1
$region0: #{tpu_custom_call.1}
  #allocation0 [shape = 'u32[]', space=smem, size = 0x4, offset = 0x4, fixed_abs, tag = 'smem constant byte address 0x4 - core index']
  #allocation1 [shape = 'u32[144,128]{1,0:T(1,128)}', space=vmem, size = 0x12000, scoped, tag = 'internal scratch']
  %s0 = inlined_call_operand.vmem [shape: f32[32,64], index: 0, kind: input, shape index: {}]
  %s1 = inlined_call_operand.vmem [shape: f32[64,32], index: 1, kind: input, shape index: {}]
  %s2 = inlined_call_operand.vmem [shape: f32[1,32], index: 2, kind: input, shape index: {}]
  %s3 = inlined_call_operand.vmem [shape: f32[1,32], index: 3, kind: input, shape index: {}]
  %s4 = inlined_call_operand.hbm [shape: f32[32,32], index: 4, kind: output, shape index: {}]
  %s5 = sld [smem:[#allocation0]]
  $region26: #{tpu_custom_call.1} parent=0
    _
  %s7 = ssub.s32 1, %s5
  %s8 = scalar_select 0, %s7, %s5
  $region1: #{tpu_custom_call.1} parent=0
    #allocation2 [shape = 'u8[16384]{0}', space=vmem, size = 0x4000, scoped, tag = 'output window, operand 0, single buffered']
    #allocation3 [shape = 's32[1]{0}', space=sflag, size = 0x4, scoped, tag = 'scoped memory for tpu_custom_call.1']
    %9 = vsyncpa [#allocation3], 0
    // Predicated region
    $region2: #{tpu_custom_call.1} parent=1 // pred_check
      _
    $region3: #{tpu_custom_call.1} parent=1 // pred_check_branch
      %11 = sbr.rel (0) target = $region5
    $region4: #{tpu_custom_call.1} parent=1 // pred_region
      _
    $region5: #{tpu_custom_call.1} parent=1 // pred_fallthru
      _
    // Predicated region
    $region6: #{tpu_custom_call.1} parent=1 // pred_check
      _
    $region7: #{tpu_custom_call.1} parent=1 // pred_check_branch
      %13 = sbr.rel (0) target = $region9
    $region8: #{tpu_custom_call.1} parent=1 // pred_region
      _
    $region9: #{tpu_custom_call.1} parent=1 // pred_fallthru
      _
    // Predicated region
    $region10: #{tpu_custom_call.1} parent=1 // pred_check
      _
    $region11: #{tpu_custom_call.1} parent=1 // pred_check_branch
      %15 = sbr.rel (0) target = $region13
    $region12: #{tpu_custom_call.1} parent=1 // pred_region
      _
    $region13: #{tpu_custom_call.1} parent=1 // pred_fallthru
      _
    // Predicated region
    $region14: #{tpu_custom_call.1} parent=1 // pred_check
      _
    $region15: #{tpu_custom_call.1} parent=1 // pred_check_branch
      %17 = sbr.rel (0) target = $region17
    $region16: #{tpu_custom_call.1} parent=1 // pred_region
      _
    $region17: #{tpu_custom_call.1} parent=1 // pred_fallthru
      _
    %v18 = vld [vmem:[%s0] sm:$0xff]
    %v19 = vld [vmem:[%s0 + $0x8] sm:$0xff]
    %v20 = vld [vmem:[%s0 + $0x10] sm:$0xff]
    %v21 = vld [vmem:[%s0 + $0x18] sm:$0xff]
    %vm22 = vcmask 523264
    %v23 = vsel %vm22, %v18, 0.0
    %24 = vadd.xlane.f32.xlu0 %v23
    %v25 = vpop.xlane.xlu0 %24
    %v26 = vsel %vm22, %v19, 0.0
    %27 = vadd.xlane.f32.xlu0 %v26
    %v28 = vpop.xlane.xlu0 %27
    %v29 = vsel %vm22, %v20, 0.0
    %30 = vadd.xlane.f32.xlu0 %v29
    %v31 = vpop.xlane.xlu0 %30
    %v32 = vsel %vm22, %v21, 0.0
    %33 = vadd.xlane.f32.xlu0 %v32
    %v34 = vpop.xlane.xlu0 %33
    %v35 = vmul.f32 %v18, %v18
    %v36 = vmul.f32 %v19, %v19
    %v37 = vmul.f32 %v20, %v20
    %v38 = vmul.f32 %v21, %v21
    %v39 = vsel %vm22, %v35, 0.0
    %40 = vadd.xlane.f32.xlu0 %v39
    %v41 = vpop.xlane.xlu0 %40
    %v42 = vsel %vm22, %v36, 0.0
    %43 = vadd.xlane.f32.xlu0 %v42
    %v44 = vpop.xlane.xlu0 %43
    %v45 = vsel %vm22, %v37, 0.0
    %46 = vadd.xlane.f32.xlu0 %v45
    %v47 = vpop.xlane.xlu0 %46
    %v48 = vsel %vm22, %v38, 0.0
    %49 = vadd.xlane.f32.xlu0 %v48
    %v50 = vpop.xlane.xlu0 %49
    %v51 = vmul.f32 %v25, 0.015625
    %v52 = vmul.f32 %v28, 0.015625
    %v53 = vmul.f32 %v31, 0.015625
    %v54 = vmul.f32 %v34, 0.015625
    %v55 = vmul.f32 %v41, 0.015625
    %v56 = vmul.f32 %v44, 0.015625
    %v57 = vmul.f32 %v47, 0.015625
    %v58 = vmul.f32 %v50, 0.015625
    %v59 = vmul.f32 %v51, %v51
    %v60 = vmul.f32 %v52, %v52
    %v61 = vmul.f32 %v53, %v53
    %v62 = vmul.f32 %v54, %v54
    %v63 = vsub.f32 %v55, %v59
    %v64 = vsub.f32 %v56, %v60
    %v65 = vsub.f32 %v57, %v61
    %v66 = vsub.f32 %v58, %v62
    %v67 = vmax.f32 %v63, 0.0
    %v68 = vmax.f32 %v64, 0.0
    %v69 = vmax.f32 %v65, 0.0
    %v70 = vmax.f32 %v66, 0.0
    %v71 = vadd.f32 %v67, 1e-05
    %v72 = vadd.f32 %v68, 1e-05
    %v73 = vadd.f32 %v69, 1e-05
    %v74 = vadd.f32 %v70, 1e-05
    %v75 = vrsqrt.pop %v71
    %v76 = vrsqrt.pop %v72
    %v77 = vrsqrt.pop %v73
    %v78 = vrsqrt.pop %v74
    %v79 = vld [vmem:[%s1] sm:$0xff]
    %v80 = vld [vmem:[%s1 + $0x8] sm:$0xff]
    %v81 = vld [vmem:[%s1 + $0x10] sm:$0xff]
    %v82 = vld [vmem:[%s1 + $0x18] sm:$0xff]
    %v83 = vld [vmem:[%s1 + $0x20] sm:$0xff]
    %v84 = vld [vmem:[%s1 + $0x28] sm:$0xff]
    %v85 = vld [vmem:[%s1 + $0x30] sm:$0xff]
    %v86 = vld [vmem:[%s1 + $0x38] sm:$0xff]
    %v88 = vsel %vm22, %v18, 0
    %v91 = vsel %vm22, %v19, 0
    %v94 = vsel %vm22, %v20, 0
    %v97 = vsel %vm22, %v21, 0
    %99 = vmatprep.subr.mxu0 0.0
    %100 = vmatpush1.msra.mxu0 %v79
    %101 = vmatprep.subr.mxu0 0.0
    %102 = vmatpush1.msra.mxu0 %v80
    %103 = vmatprep.subr.mxu0 0.0
    %104 = vmatpush1.msra.mxu0 %v81
    %105 = vmatprep.subr.mxu0 0.0
    %106 = vmatpush1.msra.mxu0 %v82
    %107 = vmatprep.subr.mxu0 0.0
    %108 = vmatpush1.msra.mxu0 %v83
    %109 = vmatprep.subr.mxu0 0.0
    %110 = vmatpush1.msra.mxu0 %v84
    %111 = vmatprep.subr.mxu0 0.0
    %112 = vmatpush1.msra.mxu0 %v85
    %113 = vmatprep.subr.mxu0 0.0
    %114 = vmatpush1.msra.mxu0 %v86
    %115 = vmatprep.subr.mxu0 0.0
    %116 = vmatpush1.msra.mxu0 0.0
    %117 = vmatprep.subr.mxu0 0.0
    %118 = vmatpush1.msra.mxu0 0.0
    %119 = vmatprep.subr.mxu0 0.0
    %120 = vmatpush1.msra.mxu0 0.0
    %121 = vmatprep.subr.mxu0 0.0
    %122 = vmatpush1.msra.mxu0 0.0
    %123 = vmatprep.subr.mxu0 0.0
    %124 = vmatpush1.msra.mxu0 0.0
    %125 = vmatprep.subr.mxu0 0.0
    %126 = vmatpush1.msra.mxu0 0.0
    %127 = vmatprep.subr.mxu0 0.0
    %128 = vmatpush1.msra.mxu0 0.0
    %129 = vmatprep.subr.mxu0 0.0
    %130 = vmatpush1.msra.mxu0 0.0
    %131 = vmatprep.subr.mxu0 0.0
    %132 = vmatpush1.msra.mxu0 0.0
    %133 = vmatprep.subr.mxu0 0.0
    %134 = vmatpush1.msra.mxu0 0.0
    %135 = vmatprep.subr.mxu0 0.0
    %136 = vmatpush1.msra.mxu0 0.0
    %137 = vmatprep.subr.mxu0 0.0
    %138 = vmatpush1.msra.mxu0 0.0
    %139 = vmatprep.subr.mxu0 0.0
    %140 = vmatpush1.msra.mxu0 0.0
    %141 = vmatprep.subr.mxu0 0.0
    %142 = vmatpush1.msra.mxu0 0.0
    %143 = vmatprep.subr.mxu0 0.0
    %144 = vmatpush1.msra.mxu0 0.0
    %145 = vmatprep.subr.mxu0 0.0
    %146 = vmatpush1.msra.mxu0 0.0
    %147 = vmatprep.subr.mxu0 0.0
    %148 = vmatpush1.msra.mxu0 0.0
    %149 = vmatprep.subr.mxu0 0.0
    %150 = vmatpush1.msra.mxu0 0.0
    %151 = vmatprep.subr.mxu0 0.0
    %152 = vmatpush1.msra.mxu0 0.0
    %153 = vmatprep.subr.mxu0 0.0
    %154 = vmatpush1.msra.mxu0 0.0
    %155 = vmatprep.subr.mxu0 0.0
    %156 = vmatpush1.msra.mxu0 0.0
    %157 = vmatprep.subr.mxu0 0.0
    %158 = vmatpush1.msra.mxu0 0.0
    %159 = vmatprep.subr.mxu0 0.0
    %160 = vmatpush1.msra.mxu0 0.0
    %161 = vmatprep.subr.mxu0 0.0
    %162 = vmatpush1.msra.mxu0 0.0
    %163 = vmatprep.mubr.f32.mxu0 0.0
    %164 = vmatmul.mubr.f32.gmra.mrb[0].mxu0 %v88
    %v165 = vpop.f32.mrb[0].mxu0
    %v166 = vadd.f32 0.0, %v165
    %v167 = vpop.f32.mrb[0].mxu0
    %168 = vmatprep.mubr.f32.mxu0 0.0
    %169 = vmatmul.mubr.f32.gmra.mrb[0].mxu0 %v91
    %v170 = vpop.f32.mrb[0].mxu0
    %v171 = vadd.f32 0.0, %v170
    %v172 = vpop.f32.mrb[0].mxu0
    %173 = vmatprep.mubr.f32.mxu0 0.0
    %174 = vmatmul.mubr.f32.gmra.mrb[0].mxu0 %v94
    %v175 = vpop.f32.mrb[0].mxu0
    %v176 = vadd.f32 0.0, %v175
    %v177 = vpop.f32.mrb[0].mxu0
    %178 = vmatprep.mubr.f32.mxu0 0.0
    %179 = vmatmul.mubr.f32.gmra.mrb[0].mxu0 %v97
    %v180 = vpop.f32.mrb[0].mxu0
    %v181 = vadd.f32 0.0, %v180
    %v182 = vpop.f32.mrb[0].mxu0
    %183 = vdwg.mxu0
    %v184 = vmul.f32 %v75, %v166
    %v185 = vmul.f32 %v76, %v171
    %v186 = vmul.f32 %v77, %v176
    %v187 = vmul.f32 %v78, %v181
    %v188 = vmul.f32 %v75, %v51
    %v189 = vmul.f32 %v76, %v52
    %v190 = vmul.f32 %v77, %v53
    %v191 = vmul.f32 %v78, %v54
    %v192 = vld [vmem:[%s2] sm:$0x1]
    %v194 = vlaneseq
    %v195 = vshrl.u32 %v194, 7
    %v196 = vsub.s32 0, %v195
    %v197 = vrot.slane %v192, %v196
    %v199 = vmul.f32 %v188, %v197
    %v200 = vmul.f32 %v189, %v197
    %v201 = vmul.f32 %v190, %v197
    %v202 = vmul.f32 %v191, %v197
    %v203 = vsub.f32 %v184, %v199
    %v204 = vsub.f32 %v185, %v200
    %v205 = vsub.f32 %v186, %v201
    %v206 = vsub.f32 %v187, %v202
    %v207 = vld [vmem:[%s3] sm:$0x1]
    %v209 = vlaneseq
    %v210 = vshrl.u32 %v209, 7
    %v211 = vsub.s32 0, %v210
    %v212 = vrot.slane %v207, %v211
    %v214 = vadd.f32 %v203, %v212
    %v215 = vadd.f32 %v204, %v212
    %v216 = vadd.f32 %v205, %v212
    %v217 = vadd.f32 %v206, %v212
    %vm218 = vcmask 261120
    %219 = vst.msk [vmem:[#allocation2] sm:$0xff] %vm218, %v214
    %220 = vst.msk [vmem:[#allocation2 + $0x8] sm:$0xff] %vm218, %v215
    %221 = vst.msk [vmem:[#allocation2 + $0x10] sm:$0xff] %vm218, %v216
    %222 = vst.msk [vmem:[#allocation2 + $0x18] sm:$0xff] %vm218, %v217
    // Predicated region
    $region18: #{tpu_custom_call.1} parent=1 // pred_check
      _
    $region19: #{tpu_custom_call.1} parent=1 // pred_check_branch
      %224 = sbr.rel (0) target = $region21
    $region20: #{tpu_custom_call.1} parent=1 // pred_region
      %s226 = ssub.s32 512, 512
      %227 = vsyncadd [#allocation3], %s226
      %s228 = sshll.u32 [#allocation2], 4
      %s229 = int_to_ptr.vmem [resolvable:$true] %s228
      %234 = dma.vmem_to_hbm [thread:$0]  %s229, 512, %s4, [#allocation3], 128, 128, 8
    $region21: #{tpu_custom_call.1} parent=1 // pred_fallthru
      _
    // Predicated region
    $region22: #{tpu_custom_call.1} parent=1 // pred_check
      _
    $region23: #{tpu_custom_call.1} parent=1 // pred_check_branch
      %236 = sbr.rel (0) target = $region25
    $region24: #{tpu_custom_call.1} parent=1 // pred_region
      %237 = dma.done [#allocation3], 512
    $region25: #{tpu_custom_call.1} parent=1 // pred_fallthru
      _
    %238 = vsyncpa [#allocation3], 1

// kernel: tpu_custom_call.1
$region0: #{tpu_custom_call.1}
  #allocation0 [shape = 'u32[]', space=smem, size = 0x4, offset = 0x4, fixed_abs, tag = 'smem constant byte address 0x4 - core index']
  #allocation1 [shape = 'u32[144,128]{1,0:T(1,128)}', space=vmem, size = 0x12000, scoped, tag = 'internal scratch']
  %s0 = inlined_call_operand.vmem [shape: f32[32,64], index: 0, kind: input, shape index: {}]
  %s1 = inlined_call_operand.vmem [shape: f32[64,32], index: 1, kind: input, shape index: {}]
  %s2 = inlined_call_operand.vmem [shape: f32[1,32], index: 2, kind: input, shape index: {}]
  %s3 = inlined_call_operand.vmem [shape: f32[1,32], index: 3, kind: input, shape index: {}]
  %s4 = inlined_call_operand.hbm [shape: f32[32,32], index: 4, kind: output, shape index: {}]
  %s5 = sld [smem:[#allocation0]]
  $region26: #{tpu_custom_call.1} parent=0
    _
  %s7 = ssub.s32 1, %s5
  %s8 = scalar_select 0, %s7, %s5
  $region1: #{tpu_custom_call.1} parent=0
    #allocation2 [shape = 'u8[16384]{0}', space=vmem, size = 0x4000, scoped, tag = 'output window, operand 0, single buffered']
    #allocation3 [shape = 's32[1]{0}', space=sflag, size = 0x4, scoped, tag = 'scoped memory for tpu_custom_call.1']
    %9 = vsyncpa [#allocation3], 0
    // Predicated region
    $region2: #{tpu_custom_call.1} parent=1 // pred_check
      _
    $region3: #{tpu_custom_call.1} parent=1 // pred_check_branch
      %11 = sbr.rel (0) target = $region5
    $region4: #{tpu_custom_call.1} parent=1 // pred_region
      _
    $region5: #{tpu_custom_call.1} parent=1 // pred_fallthru
      _
    // Predicated region
    $region6: #{tpu_custom_call.1} parent=1 // pred_check
      _
    $region7: #{tpu_custom_call.1} parent=1 // pred_check_branch
      %13 = sbr.rel (0) target = $region9
    $region8: #{tpu_custom_call.1} parent=1 // pred_region
      _
    $region9: #{tpu_custom_call.1} parent=1 // pred_fallthru
      _
    // Predicated region
    $region10: #{tpu_custom_call.1} parent=1 // pred_check
      _
    $region11: #{tpu_custom_call.1} parent=1 // pred_check_branch
      %15 = sbr.rel (0) target = $region13
    $region12: #{tpu_custom_call.1} parent=1 // pred_region
      _
    $region13: #{tpu_custom_call.1} parent=1 // pred_fallthru
      _
    // Predicated region
    $region14: #{tpu_custom_call.1} parent=1 // pred_check
      _
    $region15: #{tpu_custom_call.1} parent=1 // pred_check_branch
      %17 = sbr.rel (0) target = $region17
    $region16: #{tpu_custom_call.1} parent=1 // pred_region
      _
    $region17: #{tpu_custom_call.1} parent=1 // pred_fallthru
      _
    %v18 = vld [vmem:[%s0] sm:$0xff]
    %v19 = vld [vmem:[%s0 + $0x8] sm:$0xff]
    %v20 = vld [vmem:[%s0 + $0x10] sm:$0xff]
    %v21 = vld [vmem:[%s0 + $0x18] sm:$0xff]
    %vm22 = vcmask 523264
    %v23 = vsel %vm22, %v18, 0.0
    %24 = vadd.xlane.f32.xlu0 %v23
    %v25 = vpop.xlane.xlu0 %24
    %v26 = vsel %vm22, %v19, 0.0
    %27 = vadd.xlane.f32.xlu0 %v26
    %v28 = vpop.xlane.xlu0 %27
    %v29 = vsel %vm22, %v20, 0.0
    %30 = vadd.xlane.f32.xlu0 %v29
    %v31 = vpop.xlane.xlu0 %30
    %v32 = vsel %vm22, %v21, 0.0
    %33 = vadd.xlane.f32.xlu0 %v32
    %v34 = vpop.xlane.xlu0 %33
    %v35 = vmul.f32 %v18, %v18
    %v36 = vmul.f32 %v19, %v19
    %v37 = vmul.f32 %v20, %v20
    %v38 = vmul.f32 %v21, %v21
    %v39 = vsel %vm22, %v35, 0.0
    %40 = vadd.xlane.f32.xlu0 %v39
    %v41 = vpop.xlane.xlu0 %40
    %v42 = vsel %vm22, %v36, 0.0
    %43 = vadd.xlane.f32.xlu0 %v42
    %v44 = vpop.xlane.xlu0 %43
    %v45 = vsel %vm22, %v37, 0.0
    %46 = vadd.xlane.f32.xlu0 %v45
    %v47 = vpop.xlane.xlu0 %46
    %v48 = vsel %vm22, %v38, 0.0
    %49 = vadd.xlane.f32.xlu0 %v48
    %v50 = vpop.xlane.xlu0 %49
    %v51 = vmul.f32 %v25, 0.015625
    %v52 = vmul.f32 %v28, 0.015625
    %v53 = vmul.f32 %v31, 0.015625
    %v54 = vmul.f32 %v34, 0.015625
    %v55 = vmul.f32 %v41, 0.015625
    %v56 = vmul.f32 %v44, 0.015625
    %v57 = vmul.f32 %v47, 0.015625
    %v58 = vmul.f32 %v50, 0.015625
    %v59 = vmul.f32 %v51, %v51
    %v60 = vmul.f32 %v52, %v52
    %v61 = vmul.f32 %v53, %v53
    %v62 = vmul.f32 %v54, %v54
    %v63 = vsub.f32 %v55, %v59
    %v64 = vsub.f32 %v56, %v60
    %v65 = vsub.f32 %v57, %v61
    %v66 = vsub.f32 %v58, %v62
    %v67 = vmax.f32 %v63, 0.0
    %v68 = vmax.f32 %v64, 0.0
    %v69 = vmax.f32 %v65, 0.0
    %v70 = vmax.f32 %v66, 0.0
    %v71 = vadd.f32 %v67, 1e-05
    %v72 = vadd.f32 %v68, 1e-05
    %v73 = vadd.f32 %v69, 1e-05
    %v74 = vadd.f32 %v70, 1e-05
    %v75 = vrsqrt.pop %v71
    %v76 = vrsqrt.pop %v72
    %v77 = vrsqrt.pop %v73
    %v78 = vrsqrt.pop %v74
    %v79 = vld [vmem:[%s1] sm:$0xff]
    %v80 = vld [vmem:[%s1 + $0x8] sm:$0xff]
    %v81 = vld [vmem:[%s1 + $0x10] sm:$0xff]
    %v82 = vld [vmem:[%s1 + $0x18] sm:$0xff]
    %v83 = vld [vmem:[%s1 + $0x20] sm:$0xff]
    %v84 = vld [vmem:[%s1 + $0x28] sm:$0xff]
    %v85 = vld [vmem:[%s1 + $0x30] sm:$0xff]
    %v86 = vld [vmem:[%s1 + $0x38] sm:$0xff]
    %v88 = vsel %vm22, %v18, 0
    %v91 = vsel %vm22, %v19, 0
    %v94 = vsel %vm22, %v20, 0
    %v97 = vsel %vm22, %v21, 0
    %99 = vmatprep.subr.mxu0 0.0
    %100 = vmatpush1.msra.mxu0 %v79
    %101 = vmatprep.subr.mxu0 0.0
    %102 = vmatpush1.msra.mxu0 %v80
    %103 = vmatprep.subr.mxu0 0.0
    %104 = vmatpush1.msra.mxu0 %v81
    %105 = vmatprep.subr.mxu0 0.0
    %106 = vmatpush1.msra.mxu0 %v82
    %107 = vmatprep.subr.mxu0 0.0
    %108 = vmatpush1.msra.mxu0 %v83
    %109 = vmatprep.subr.mxu0 0.0
    %110 = vmatpush1.msra.mxu0 %v84
    %111 = vmatprep.subr.mxu0 0.0
    %112 = vmatpush1.msra.mxu0 %v85
    %113 = vmatprep.subr.mxu0 0.0
    %114 = vmatpush1.msra.mxu0 %v86
    %115 = vmatprep.subr.mxu0 0.0
    %116 = vmatpush1.msra.mxu0 0.0
    %117 = vmatprep.subr.mxu0 0.0
    %118 = vmatpush1.msra.mxu0 0.0
    %119 = vmatprep.subr.mxu0 0.0
    %120 = vmatpush1.msra.mxu0 0.0
    %121 = vmatprep.subr.mxu0 0.0
    %122 = vmatpush1.msra.mxu0 0.0
    %123 = vmatprep.subr.mxu0 0.0
    %124 = vmatpush1.msra.mxu0 0.0
    %125 = vmatprep.subr.mxu0 0.0
    %126 = vmatpush1.msra.mxu0 0.0
    %127 = vmatprep.subr.mxu0 0.0
    %128 = vmatpush1.msra.mxu0 0.0
    %129 = vmatprep.subr.mxu0 0.0
    %130 = vmatpush1.msra.mxu0 0.0
    %131 = vmatprep.subr.mxu0 0.0
    %132 = vmatpush1.msra.mxu0 0.0
    %133 = vmatprep.subr.mxu0 0.0
    %134 = vmatpush1.msra.mxu0 0.0
    %135 = vmatprep.subr.mxu0 0.0
    %136 = vmatpush1.msra.mxu0 0.0
    %137 = vmatprep.subr.mxu0 0.0
    %138 = vmatpush1.msra.mxu0 0.0
    %139 = vmatprep.subr.mxu0 0.0
    %140 = vmatpush1.msra.mxu0 0.0
    %141 = vmatprep.subr.mxu0 0.0
    %142 = vmatpush1.msra.mxu0 0.0
    %143 = vmatprep.subr.mxu0 0.0
    %144 = vmatpush1.msra.mxu0 0.0
    %145 = vmatprep.subr.mxu0 0.0
    %146 = vmatpush1.msra.mxu0 0.0
    %147 = vmatprep.subr.mxu0 0.0
    %148 = vmatpush1.msra.mxu0 0.0
    %149 = vmatprep.subr.mxu0 0.0
    %150 = vmatpush1.msra.mxu0 0.0
    %151 = vmatprep.subr.mxu0 0.0
    %152 = vmatpush1.msra.mxu0 0.0
    %153 = vmatprep.subr.mxu0 0.0
    %154 = vmatpush1.msra.mxu0 0.0
    %155 = vmatprep.subr.mxu0 0.0
    %156 = vmatpush1.msra.mxu0 0.0
    %157 = vmatprep.subr.mxu0 0.0
    %158 = vmatpush1.msra.mxu0 0.0
    %159 = vmatprep.subr.mxu0 0.0
    %160 = vmatpush1.msra.mxu0 0.0
    %161 = vmatprep.subr.mxu0 0.0
    %162 = vmatpush1.msra.mxu0 0.0
    %163 = vmatprep.mubr.f32.mxu0 0.0
    %164 = vmatmul.mubr.f32.gmra.mrb[0].mxu0 %v88
    %v165 = vpop.f32.mrb[0].mxu0
    %v166 = vadd.f32 0.0, %v165
    %v167 = vpop.f32.mrb[0].mxu0
    %168 = vmatprep.mubr.f32.mxu0 0.0
    %169 = vmatmul.mubr.f32.gmra.mrb[0].mxu0 %v91
    %v170 = vpop.f32.mrb[0].mxu0
    %v171 = vadd.f32 0.0, %v170
    %v172 = vpop.f32.mrb[0].mxu0
    %173 = vmatprep.mubr.f32.mxu0 0.0
    %174 = vmatmul.mubr.f32.gmra.mrb[0].mxu0 %v94
    %v175 = vpop.f32.mrb[0].mxu0
    %v176 = vadd.f32 0.0, %v175
    %v177 = vpop.f32.mrb[0].mxu0
    %178 = vmatprep.mubr.f32.mxu0 0.0
    %179 = vmatmul.mubr.f32.gmra.mrb[0].mxu0 %v97
    %v180 = vpop.f32.mrb[0].mxu0
    %v181 = vadd.f32 0.0, %v180
    %v182 = vpop.f32.mrb[0].mxu0
    %183 = vdwg.mxu0
    %v184 = vmul.f32 %v75, %v166
    %v185 = vmul.f32 %v76, %v171
    %v186 = vmul.f32 %v77, %v176
    %v187 = vmul.f32 %v78, %v181
    %v188 = vmul.f32 %v75, %v51
    %v189 = vmul.f32 %v76, %v52
    %v190 = vmul.f32 %v77, %v53
    %v191 = vmul.f32 %v78, %v54
    %v192 = vld [vmem:[%s2] sm:$0x1]
    %v194 = vlaneseq
    %v195 = vshrl.u32 %v194, 7
    %v196 = vsub.s32 0, %v195
    %v197 = vrot.slane %v192, %v196
    %v199 = vmul.f32 %v188, %v197
    %v200 = vmul.f32 %v189, %v197
    %v201 = vmul.f32 %v190, %v197
    %v202 = vmul.f32 %v191, %v197
    %v203 = vsub.f32 %v184, %v199
    %v204 = vsub.f32 %v185, %v200
    %v205 = vsub.f32 %v186, %v201
    %v206 = vsub.f32 %v187, %v202
    %v207 = vld [vmem:[%s3] sm:$0x1]
    %v209 = vlaneseq
    %v210 = vshrl.u32 %v209, 7
    %v211 = vsub.s32 0, %v210
    %v212 = vrot.slane %v207, %v211
    %v214 = vadd.f32 %v203, %v212
    %v215 = vadd.f32 %v204, %v212
    %v216 = vadd.f32 %v205, %v212
    %v217 = vadd.f32 %v206, %v212
    %vm218 = vcmask 261120
    %219 = vst.msk [vmem:[#allocation2] sm:$0xff] %vm218, %v214
    %220 = vst.msk [vmem:[#allocation2 + $0x8] sm:$0xff] %vm218, %v215
    %221 = vst.msk [vmem:[#allocation2 + $0x10] sm:$0xff] %vm218, %v216
    %222 = vst.msk [vmem:[#allocation2 + $0x18] sm:$0xff] %vm218, %v217
    // Predicated region
    $region18: #{tpu_custom_call.1} parent=1 // pred_check
      _
    $region19: #{tpu_custom_call.1} parent=1 // pred_check_branch
      %224 = sbr.rel (0) target = $region21
    $region20: #{tpu_custom_call.1} parent=1 // pred_region
      %s226 = ssub.s32 512, 512
      %227 = vsyncadd [#allocation3], %s226
      %s228 = sshll.u32 [#allocation2], 4
      %s229 = int_to_ptr.vmem [resolvable:$true] %s228
      %234 = dma.vmem_to_hbm [thread:$0]  %s229, 512, %s4, [#allocation3], 128, 128, 8
    $region21: #{tpu_custom_call.1} parent=1 // pred_fallthru
      _
    // Predicated region
    $region22: #{tpu_custom_call.1} parent=1 // pred_check
      _
    $region23: #{tpu_custom_call.1} parent=1 // pred_check_branch
      %236 = sbr.rel (0) target = $region25
    $region24: #{tpu_custom_call.1} parent=1 // pred_region
      %237 = dma.done [#allocation3], 512
    $region25: #{tpu_custom_call.1} parent=1 // pred_fallthru
      _
    %238 = vsyncpa [#allocation3], 1

</llo_original>
